<compile_context>
chip_gen: v5e
topology: v5e:2x2
jax: 0.10.0
libtpu: 0.0.40
codegen_flags: <defaults>
</compile_context>

<pallas_src>
import jax
import jax.numpy as jnp
from jax.experimental import pallas as pl
from jax.experimental.pallas import tpu as pltpu


def _actor_kernel(s_ref, w1_ref, w2_ref, w3_ref, o_ref):
    # Fused 3x (matmul + tanh). Matmul operands are bf16, accumulation is f32,
    # tanh runs in f32 on the VPU/EUP.
    x = s_ref[...]  # bf16 batch tile
    h1 = jnp.tanh(jnp.dot(x, w1_ref[...], preferred_element_type=jnp.float32))
    h2 = jnp.tanh(
        jnp.dot(h1.astype(jnp.bfloat16), w2_ref[...],
                preferred_element_type=jnp.float32))
    out = jnp.tanh(
        jnp.dot(h2.astype(jnp.bfloat16), w3_ref[...],
                preferred_element_type=jnp.float32))
    o_ref[...] = out.astype(o_ref.dtype)


def _round_up(x, m):
    return pl.cdiv(x, m) * m


def deterministic_actor_forward(s, w1_t, w2_t, w3_t, *, max_batch_tile=512):
    """Forward pass of DeterministicActor.

    s    : (B, s_dim)        float32
    w1_t : (s_dim, hidden)   float32   (transpose of nn.Linear weight)
    w2_t : (hidden, hidden)  float32
    w3_t : (hidden, a_dim)   float32
    returns (B, a_dim) float32
    """
    B, s_dim = s.shape
    hidden = w1_t.shape[1]
    a_dim = w3_t.shape[1]

    # Lane-dense output width (multiple of 128).
    a_pad = _round_up(max(a_dim, 128), 128)

    # Batch tile: multiple of 8, capped so huge batches are streamed through the
    # grid with resident weights rather than one giant VMEM tile.
    tb = min(max_batch_tile, _round_up(B, 8))
    tb = _round_up(tb, 8)
    b_pad = _round_up(B, tb)

    # Host-side casts / padding.
    s_b = s.astype(jnp.bfloat16)
    if b_pad != B:
        s_b = jnp.pad(s_b, ((0, b_pad - B), (0, 0)))
    w1_b = w1_t.astype(jnp.bfloat16)
    w2_b = w2_t.astype(jnp.bfloat16)
    w3_b = jnp.pad(w3_t, ((0, 0), (0, a_pad - a_dim))).astype(jnp.bfloat16)

    grid = (b_pad // tb,)

    out = pl.pallas_call(
        _actor_kernel,
        out_shape=jax.ShapeDtypeStruct((b_pad, a_pad), jnp.float32),
        grid=grid,
        in_specs=[
            pl.BlockSpec((tb, s_dim), lambda i: (i, 0)),       # batch tile
            pl.BlockSpec((s_dim, hidden), lambda i: (0, 0)),   # resident weights
            pl.BlockSpec((hidden, hidden), lambda i: (0, 0)),
            pl.BlockSpec((hidden, a_pad), lambda i: (0, 0)),
        ],
        out_specs=pl.BlockSpec((tb, a_pad), lambda i: (i, 0)),
        compiler_params=pltpu.CompilerParams(
            dimension_semantics=("parallel",)  # shard batch axis across TCs (v7x)
        ),
    )(s_b, w1_b, w2_b, w3_b)

    return out[:B, :a_dim]


def init_actor_params(key, s_dim, a_dim, hidden):
    """Init mirroring nn.Linear default: U(-1/sqrt(fan_in), 1/sqrt(fan_in)).

    Returns weights already transposed to (in, out) layout for the kernel.
    """
    k1, k2, k3 = jax.random.split(key, 3)

    def uniform(k, fan_in, shape):
        bound = 1.0 / jnp.sqrt(float(fan_in))
        return jax.random.uniform(k, shape, jnp.float32, -bound, bound)

    # PyTorch weight shapes are (out, in); we store the transpose (in, out).
    w1_t = uniform(k1, s_dim, (s_dim, hidden))
    w2_t = uniform(k2, hidden, (hidden, hidden))
    w3_t = uniform(k3, hidden, (hidden, a_dim))
    return w1_t, w2_t, w3_t


def _reference_forward_f32(s, w1_t, w2_t, w3_t):
    # Full-f32 pure-JAX reference (the PyTorch module's math).
    h = jnp.tanh(s @ w1_t)
    h = jnp.tanh(h @ w2_t)
    return jnp.tanh(h @ w3_t)


def _reference_forward_bf16(s, w1_t, w2_t, w3_t):
    # Reference that mimics the kernel's bf16-operand / f32-accumulate matmuls.
    def mm(a, b):
        return jnp.dot(a.astype(jnp.bfloat16), b.astype(jnp.bfloat16),
                       preferred_element_type=jnp.float32)
    h = jnp.tanh(mm(s, w1_t))
    h = jnp.tanh(mm(h, w2_t))
    return jnp.tanh(mm(h, w3_t))


if __name__ == "__main__":
    # Small shapes consistent with the module: batch=8, s_dim=16, hidden=32, a_dim=4.
    B, s_dim, a_dim, hidden = 8, 16, 4, 32

    key = jax.random.PRNGKey(0)
    k_s, k_w = jax.random.split(key)

    s = jax.random.normal(k_s, (B, s_dim), dtype=jnp.float32)
    w1_t, w2_t, w3_t = init_actor_params(k_w, s_dim, a_dim, hidden)

    out = deterministic_actor_forward(s, w1_t, w2_t, w3_t)
    out = jax.block_until_ready(out)
    assert out.shape == (B, a_dim)

    # Tight check against a bf16-operand reference (same MXU numerics).
    ref_bf16 = _reference_forward_bf16(s, w1_t, w2_t, w3_t)
    assert jnp.allclose(out, ref_bf16, atol=1e-3, rtol=1e-3), \
        "Pallas output mismatch vs bf16-operand reference"

    # Loose check against the full-f32 PyTorch-equivalent math (bf16 rounding only).
    ref_f32 = _reference_forward_f32(s, w1_t, w2_t, w3_t)
    assert jnp.allclose(out, ref_f32, atol=5e-2, rtol=5e-2), \
        "Pallas output mismatch vs f32 reference"

    print("KERNEL_OK")
</pallas_src>

<mosaic_0001>
module attributes {stable_mosaic.version = 11 : i64} {
  func.func @_actor_kernel(%arg0: i32, %arg1: memref<8x16xbf16, #tpu.memory_space<vmem>>, %arg2: memref<16x32xbf16, #tpu.memory_space<vmem>>, %arg3: memref<32x32xbf16, #tpu.memory_space<vmem>>, %arg4: memref<32x128xbf16, #tpu.memory_space<vmem>>, %arg5: memref<8x128xf32, #tpu.memory_space<vmem>>) attributes {dimension_semantics = [#tpu.dimension_semantics<parallel>], iteration_bounds = array<i64: 1>, scalar_prefetch = 0 : i64, scratch_operands = 0 : i64, tpu.core_type = #tpu.core_type<tc>, window_params = [{transform_indices = @transform_0, window_bounds = array<i64: 8, 16>}, {pipeline_mode = #tpu.pipeline_mode<synchronous>, transform_indices = @transform_1, window_bounds = array<i64: 16, 32>}, {pipeline_mode = #tpu.pipeline_mode<synchronous>, transform_indices = @transform_2, window_bounds = array<i64: 32, 32>}, {pipeline_mode = #tpu.pipeline_mode<synchronous>, transform_indices = @transform_3, window_bounds = array<i64: 32, 128>}, {transform_indices = @transform_4, window_bounds = array<i64: 8, 128>}]} {
    %c0 = arith.constant 0 : index
    %c0_0 = arith.constant 0 : index
    %0 = vector.load %arg1[%c0, %c0_0] : memref<8x16xbf16, #tpu.memory_space<vmem>>, vector<8x16xbf16>
    %c0_1 = arith.constant 0 : index
    %c0_2 = arith.constant 0 : index
    %1 = vector.load %arg2[%c0_1, %c0_2] : memref<16x32xbf16, #tpu.memory_space<vmem>>, vector<16x32xbf16>
    %cst = arith.constant dense<0.000000e+00> : vector<8x32xf32>
    %2 = tpu.matmul %0, %1, %cst {dimension_numbers = #tpu.dot_dimension_numbers<[1], [0], [0], [1], [0, 0, 1, 1], [], []>} : vector<8x16xbf16>, vector<16x32xbf16>, vector<8x32xf32> -> vector<8x32xf32>
    %3 = math.tanh %2 : vector<8x32xf32>
    %4 = arith.truncf %3 : vector<8x32xf32> to vector<8x32xbf16>
    %c0_3 = arith.constant 0 : index
    %c0_4 = arith.constant 0 : index
    %5 = vector.load %arg3[%c0_3, %c0_4] : memref<32x32xbf16, #tpu.memory_space<vmem>>, vector<32x32xbf16>
    %cst_5 = arith.constant dense<0.000000e+00> : vector<8x32xf32>
    %6 = tpu.matmul %4, %5, %cst_5 {dimension_numbers = #tpu.dot_dimension_numbers<[1], [0], [0], [1], [0, 0, 1, 1], [], []>} : vector<8x32xbf16>, vector<32x32xbf16>, vector<8x32xf32> -> vector<8x32xf32>
    %7 = math.tanh %6 : vector<8x32xf32>
    %8 = arith.truncf %7 : vector<8x32xf32> to vector<8x32xbf16>
    %c0_6 = arith.constant 0 : index
    %c0_7 = arith.constant 0 : index
    %9 = vector.load %arg4[%c0_6, %c0_7] : memref<32x128xbf16, #tpu.memory_space<vmem>>, vector<32x128xbf16>
    %cst_8 = arith.constant dense<0.000000e+00> : vector<8x128xf32>
    %10 = tpu.matmul %8, %9, %cst_8 {dimension_numbers = #tpu.dot_dimension_numbers<[1], [0], [0], [1], [0, 0, 1, 1], [], []>} : vector<8x32xbf16>, vector<32x128xbf16>, vector<8x128xf32> -> vector<8x128xf32>
    %11 = math.tanh %10 : vector<8x128xf32>
    %c0_9 = arith.constant 0 : index
    %c0_10 = arith.constant 0 : index
    %12 = vector.load %arg5[%c0_9, %c0_10] : memref<8x128xf32, #tpu.memory_space<vmem>>, vector<8x128xf32>
    tpu.vector_store %arg5[%c0_9, %c0_10], %11 {strides = array<i32>} : memref<8x128xf32, #tpu.memory_space<vmem>>, vector<8x128xf32>,
    return
  }
  func.func @transform_0(%arg0: i32) -> (i32, i32) {
    %c0_i32 = arith.constant 0 : i32
    %c0_i32_0 = arith.constant 0 : i32
    return %arg0, %c0_i32 : i32, i32
  }
  func.func @transform_1(%arg0: i32) -> (i32, i32) {
    %c0_i32 = arith.constant 0 : i32
    %c0_i32_0 = arith.constant 0 : i32
    %c0_i32_1 = arith.constant 0 : i32
    return %c0_i32, %c0_i32_0 : i32, i32
  }
  func.func @transform_2(%arg0: i32) -> (i32, i32) {
    %c0_i32 = arith.constant 0 : i32
    %c0_i32_0 = arith.constant 0 : i32
    %c0_i32_1 = arith.constant 0 : i32
    return %c0_i32, %c0_i32_0 : i32, i32
  }
  func.func @transform_3(%arg0: i32) -> (i32, i32) {
    %c0_i32 = arith.constant 0 : i32
    %c0_i32_0 = arith.constant 0 : i32
    %c0_i32_1 = arith.constant 0 : i32
    return %c0_i32, %c0_i32_0 : i32, i32
  }
  func.func @transform_4(%arg0: i32) -> (i32, i32) {
    %c0_i32 = arith.constant 0 : i32
    %c0_i32_0 = arith.constant 0 : i32
    return %arg0, %c0_i32 : i32, i32
  }
}

</mosaic_0001>

<llo_original>
// kernel: tpu_custom_call.1
$region0: #{tpu_custom_call.1}
  #allocation0 [shape = 'u32[]', space=smem, size = 0x4, offset = 0x4, fixed_abs, tag = 'smem constant byte address 0x4 - core index']
  #allocation1 [shape = 'u32[72,128]{1,0:T(1,128)}', space=vmem, size = 0x9000, scoped, tag = 'internal scratch']
  %s0 = inlined_call_operand.hbm [shape: bf16[8,16], index: 0, kind: input, shape index: {}]
  %s1 = inlined_call_operand.hbm [shape: bf16[16,32], index: 1, kind: input, shape index: {}]
  %s2 = inlined_call_operand.hbm [shape: bf16[32,32], index: 2, kind: input, shape index: {}]
  %s3 = inlined_call_operand.hbm [shape: bf16[32,128], index: 3, kind: input, shape index: {}]
  %s4 = inlined_call_operand.hbm [shape: f32[8,128], index: 4, kind: output, shape index: {}]
  %s5 = sld [smem:[#allocation0]]
  $region42: #{tpu_custom_call.1} parent=0
    _
  %s7 = ssub.s32 1, %s5
  %s8 = scalar_select 0, %s7, %s5
  $region1: #{tpu_custom_call.1} parent=0
    #allocation2 [shape = 'u8[2048]{0}', space=vmem, size = 0x800, scoped, tag = 'input window, operand 0, single buffered']
    #allocation3 [shape = 's32[1]{0}', space=sflag, size = 0x4, scoped, tag = 'scoped memory for tpu_custom_call.1']
    #allocation4 [shape = 's32[1]{0}', space=sflag, size = 0x4, scoped, tag = 'scoped memory for tpu_custom_call.1']
    #allocation5 [shape = 'u8[4096]{0}', space=vmem, size = 0x1000, scoped, tag = 'input window, operand 1, single buffered']
    #allocation6 [shape = 's32[1]{0}', space=sflag, size = 0x4, scoped, tag = 'scoped memory for tpu_custom_call.1']
    #allocation7 [shape = 'u8[8192]{0}', space=vmem, size = 0x2000, scoped, tag = 'input window, operand 2, single buffered']
    #allocation8 [shape = 'u8[8192]{0}', space=vmem, size = 0x2000, scoped, tag = 'input window, operand 3, single buffered']
    #allocation9 [shape = 's32[1]{0}', space=sflag, size = 0x4, scoped, tag = 'scoped memory for tpu_custom_call.1']
    #allocation10 [shape = 'u8[4096]{0}', space=vmem, size = 0x1000, scoped, tag = 'output window, operand 0, single buffered']
    %9 = vsyncpa [#allocation3], 0
    %10 = vsyncpa [#allocation6], 0
    %11 = vsyncpa [#allocation9], 0
    %12 = vsyncpa [#allocation4], 0
    // Predicated region
    $region2: #{tpu_custom_call.1} parent=1 // pred_check
      _
    $region3: #{tpu_custom_call.1} parent=1 // pred_check_branch
      %14 = sbr.rel (0) target = $region5
    $region4: #{tpu_custom_call.1} parent=1 // pred_region
      %16 = vsyncadd [#allocation3], 0
      %s18 = sshll.u32 %s0, 4
      %s19 = int_to_ptr.hbm [resolvable:$true] %s18
      %s20 = sshll.u32 [#allocation2], 4
      %s21 = int_to_ptr.vmem [resolvable:$true] %s20
      %23 = dma.hbm_to_vmem [thread:$0]  %s19, 64, %s21, [#allocation3]
    $region5: #{tpu_custom_call.1} parent=1 // pred_fallthru
      _
    // Predicated region
    $region6: #{tpu_custom_call.1} parent=1 // pred_check
      _
    $region7: #{tpu_custom_call.1} parent=1 // pred_check_branch
      %25 = sbr.rel (0) target = $region9
    $region8: #{tpu_custom_call.1} parent=1 // pred_region
      %27 = vsyncadd [#allocation6], 0
      %s28 = sshll.u32 %s1, 4
      %s29 = int_to_ptr.hbm [resolvable:$true] %s28
      %s30 = sshll.u32 [#allocation5], 4
      %s31 = int_to_ptr.vmem [resolvable:$true] %s30
      %36 = dma.hbm_to_vmem [thread:$0]  %s29, 128, %s31, [#allocation6], 64, 64, 4
    $region9: #{tpu_custom_call.1} parent=1 // pred_fallthru
      _
    // Predicated region
    $region10: #{tpu_custom_call.1} parent=1 // pred_check
      _
    $region11: #{tpu_custom_call.1} parent=1 // pred_check_branch
      %38 = sbr.rel (0) target = $region13
    $region12: #{tpu_custom_call.1} parent=1 // pred_region
      %40 = vsyncadd [#allocation6], 0
      %s41 = sshll.u32 %s2, 4
      %s42 = int_to_ptr.hbm [resolvable:$true] %s41
      %s43 = sshll.u32 [#allocation7], 4
      %s44 = int_to_ptr.vmem [resolvable:$true] %s43
      %49 = dma.hbm_to_vmem [thread:$0]  %s42, 256, %s44, [#allocation6], 64, 64, 4
    $region13: #{tpu_custom_call.1} parent=1 // pred_fallthru
      _
    // Predicated region
    $region14: #{tpu_custom_call.1} parent=1 // pred_check
      _
    $region15: #{tpu_custom_call.1} parent=1 // pred_check_branch
      %51 = sbr.rel (0) target = $region17
    $region16: #{tpu_custom_call.1} parent=1 // pred_region
      %53 = vsyncadd [#allocation9], 0
      %s54 = sshll.u32 %s3, 4
      %s55 = int_to_ptr.hbm [resolvable:$true] %s54
      %s56 = sshll.u32 [#allocation8], 4
      %s57 = int_to_ptr.vmem [resolvable:$true] %s56
      %62 = dma.hbm_to_vmem [thread:$0]  %s55, 256, %s57, [#allocation9], 64, 64, 4
    $region17: #{tpu_custom_call.1} parent=1 // pred_fallthru
      _
    // Predicated region
    $region18: #{tpu_custom_call.1} parent=1 // pred_check
      _
    $region19: #{tpu_custom_call.1} parent=1 // pred_check_branch
      %64 = sbr.rel (0) target = $region21
    $region20: #{tpu_custom_call.1} parent=1 // pred_region
      %66 = dma.done [#allocation3], 64
    $region21: #{tpu_custom_call.1} parent=1 // pred_fallthru
      _
    // Predicated region
    $region22: #{tpu_custom_call.1} parent=1 // pred_check
      _
    $region23: #{tpu_custom_call.1} parent=1 // pred_check_branch
      %68 = sbr.rel (0) target = $region25
    $region24: #{tpu_custom_call.1} parent=1 // pred_region
      %70 = dma.done [#allocation6], 128
    $region25: #{tpu_custom_call.1} parent=1 // pred_fallthru
      _
    // Predicated region
    $region26: #{tpu_custom_call.1} parent=1 // pred_check
      _
    $region27: #{tpu_custom_call.1} parent=1 // pred_check_branch
      %72 = sbr.rel (0) target = $region29
    $region28: #{tpu_custom_call.1} parent=1 // pred_region
      %74 = dma.done [#allocation6], 256
    $region29: #{tpu_custom_call.1} parent=1 // pred_fallthru
      _
    // Predicated region
    $region30: #{tpu_custom_call.1} parent=1 // pred_check
      _
    $region31: #{tpu_custom_call.1} parent=1 // pred_check_branch
      %76 = sbr.rel (0) target = $region33
    $region32: #{tpu_custom_call.1} parent=1 // pred_region
      %78 = dma.done [#allocation9], 256
    $region33: #{tpu_custom_call.1} parent=1 // pred_fallthru
      _
    %v80 = vld [vmem:[#allocation2] sm:$0xf]
    %v81 = vld [vmem:[#allocation5] sm:$0xf]
    %v82 = vld [vmem:[#allocation5 + $0x4] sm:$0xf]
    %v85 = vunpack.c.l.b16 %v81
    %v86 = vunpack.c.l.b16 %v82
    %v87 = vpack.c.b16 %v86, %v85
    %vm89 = vcmask 130048
    %v91 = vsel %vm89, %v80, 0
    %93 = vmatpush.bf16.msra.mxu0 0
    %94 = vmatpush.bf16.msra.mxu0 0
    %95 = vmatpush.bf16.msra.mxu0 0
    %96 = vmatpush.bf16.msra.mxu0 0
    %97 = vmatpush.bf16.msra.mxu0 0
    %98 = vmatpush.bf16.msra.mxu0 0
    %99 = vmatpush.bf16.msra.mxu0 0
    %100 = vmatpush.bf16.msra.mxu0 %v87
    %101 = vmatmul.bf16.gmra.mxu0 %v91
    %v102 = vpop.f32.mrf.mxu0
    %v103 = vadd.f32 0.0, %v102
    %v104 = vpop.f32.mrf.mxu0
    %105 = vdwg.mxu0
    %v106 = vtanh.pop %v103
    %v107 = vpack.c.bf16 %v106, %v106
    %v108 = vld [vmem:[#allocation7] sm:$0xf]
    %v109 = vld [vmem:[#allocation7 + $0x4] sm:$0xf]
    %v110 = vld [vmem:[#allocation7 + $0x8] sm:$0xf]
    %v111 = vld [vmem:[#allocation7 + $0xc] sm:$0xf]
    %v116 = vunpack.c.l.b16 %v108
    %v117 = vunpack.c.l.b16 %v109
    %v118 = vunpack.c.l.b16 %v110
    %v119 = vunpack.c.l.b16 %v111
    %v120 = vpack.c.b16 %v117, %v116
    %v121 = vpack.c.b16 %v119, %v118
    %vm124 = vcmask 261120
    %v126 = vsel %vm124, %v107, 0
    %128 = vmatpush.bf16.msra.mxu0 0
    %129 = vmatpush.bf16.msra.mxu0 0
    %130 = vmatpush.bf16.msra.mxu0 0
    %131 = vmatpush.bf16.msra.mxu0 0
    %132 = vmatpush.bf16.msra.mxu0 0
    %133 = vmatpush.bf16.msra.mxu0 0
    %134 = vmatpush.bf16.msra.mxu0 %v121
    %135 = vmatpush.bf16.msra.mxu0 %v120
    %136 = vmatmul.bf16.gmra.mxu0 %v126
    %v137 = vpop.f32.mrf.mxu0
    %v138 = vadd.f32 0.0, %v137
    %v139 = vpop.f32.mrf.mxu0
    %140 = vdwg.mxu0
    %v141 = vtanh.pop %v138
    %v142 = vpack.c.bf16 %v141, %v141
    %v143 = vld [vmem:[#allocation8] sm:$0xf]
    %v144 = vld [vmem:[#allocation8 + $0x4] sm:$0xf]
    %v145 = vld [vmem:[#allocation8 + $0x8] sm:$0xf]
    %v146 = vld [vmem:[#allocation8 + $0xc] sm:$0xf]
    %v151 = vunpack.c.l.b16 %v143
    %v152 = vunpack.c.l.b16 %v144
    %v153 = vunpack.c.l.b16 %v145
    %v154 = vunpack.c.l.b16 %v146
    %v155 = vpack.c.b16 %v152, %v151
    %v156 = vpack.c.b16 %v154, %v153
    %v160 = vsel %vm124, %v142, 0
    %162 = vmatpush.bf16.msra.mxu0 0
    %163 = vmatpush.bf16.msra.mxu0 0
    %164 = vmatpush.bf16.msra.mxu0 0
    %165 = vmatpush.bf16.msra.mxu0 0
    %166 = vmatpush.bf16.msra.mxu0 0
    %167 = vmatpush.bf16.msra.mxu0 0
    %168 = vmatpush.bf16.msra.mxu0 %v156
    %169 = vmatpush.bf16.msra.mxu0 %v155
    %170 = vmatmul.bf16.gmra.mxu0 %v160
    %v171 = vpop.f32.mrf.mxu0
    %v172 = vadd.f32 0.0, %v171
    %v173 = vpop.f32.mrf.mxu0
    %174 = vdwg.mxu0
    %v175 = vtanh.pop %v172
    %176 = vst [vmem:[#allocation10] sm:$0xff] %v175
    // Predicated region
    $region34: #{tpu_custom_call.1} parent=1 // pred_check
      _
    $region35: #{tpu_custom_call.1} parent=1 // pred_check_branch
      %178 = sbr.rel (0) target = $region37
    $region36: #{tpu_custom_call.1} parent=1 // pred_region
      %180 = vsyncadd [#allocation4], 0
      %s182 = sshll.u32 [#allocation10], 4
      %s183 = int_to_ptr.vmem [resolvable:$true] %s182
      %s184 = sshll.u32 %s4, 4
      %s185 = int_to_ptr.hbm [resolvable:$true] %s184
      %187 = dma.vmem_to_hbm [thread:$0]  %s183, 128, %s185, [#allocation4]
    $region37: #{tpu_custom_call.1} parent=1 // pred_fallthru
      _
    // Predicated region
    $region38: #{tpu_custom_call.1} parent=1 // pred_check
      _
    $region39: #{tpu_custom_call.1} parent=1 // pred_check_branch
      %189 = sbr.rel (0) target = $region41
    $region40: #{tpu_custom_call.1} parent=1 // pred_region
      %191 = dma.done [#allocation4], 128
    $region41: #{tpu_custom_call.1} parent=1 // pred_fallthru
      _
    %192 = vsyncpa [#allocation3], 1
    %193 = vsyncpa [#allocation6], 1
    %194 = vsyncpa [#allocation9], 1
    %195 = vsyncpa [#allocation4], 1

</llo_original>
